<compile_context>
chip_gen: v7x
topology: tpu7x:2x2x1
jax: 0.10.0
libtpu: 0.0.40
codegen_flags: <defaults>
</compile_context>

<pallas_src>
import functools

import jax
import jax.numpy as jnp
from jax.experimental import pallas as pl
from jax.experimental.pallas import tpu as pltpu


def _round_up(x, m):
    return (x + m - 1) // m * m


def ffn_kernel(seed_ref, x_ref, w1_ref, b1_ref, w2_ref, b2_ref, o_ref, acc_ref,
               *, dropout_p, training):
    i = pl.program_id(0)          # token tile
    j = pl.program_id(1)          # hidden chunk (reduction axis)
    nj = pl.num_programs(1)

    @pl.when(j == 0)
    def _init():
        acc_ref[...] = jnp.zeros_like(acc_ref)

    # fc1 chunk: (tm, D) @ (D, th) on the MXU, bf16 operands, f32 accumulation.
    h = jnp.dot(x_ref[...], w1_ref[...], preferred_element_type=jnp.float32)
    h = h + b1_ref[...]
    h = jnp.maximum(h, 0.0)                                   # ReLU (f32)

    # Dropout (training only; eval == identity, matching torch.nn.Dropout).
    # TODO(synk): train-mode dropout RNG stream will not bit-match torch's RNG.
    if training and dropout_p > 0.0:
        pltpu.prng_seed(seed_ref[0] + i * nj + j)             # distinct stream per tile
        bits = pltpu.bitcast(pltpu.prng_random_bits(h.shape), jnp.uint32)
        thr = jnp.uint32(min(int(dropout_p * (2 ** 32)), 2 ** 32 - 1))
        keep = bits >= thr
        h = jnp.where(keep, h * (1.0 / (1.0 - dropout_p)), 0.0)

    # fc2 chunk: accumulate (tm, th) @ (th, D) into the resident f32 scratch.
    acc_ref[...] += jnp.dot(h.astype(jnp.bfloat16), w2_ref[...],
                            preferred_element_type=jnp.float32)

    @pl.when(j == nj - 1)
    def _finalize():
        o_ref[...] = (acc_ref[...] + b2_ref[...]).astype(o_ref.dtype)


def positionwise_feedforward(x, w1, b1, w2, b2, *, dropout_p=0.1, training=False,
                             seed=0, tm=256, th=512):
    """x: (B, S, D) float32. w1: (D, H), b1: (1, H), w2: (H, D), b2: (1, D)."""
    B, S, D = x.shape
    H = w1.shape[1]
    N = B * S

    # Lane-dense padding: D, H -> multiples of 128 (and H -> multiple of th when chunked).
    D_pad = _round_up(D, 128)
    H_pad = _round_up(H, 128)
    if H_pad > th:
        H_pad = _round_up(H_pad, th)
    else:
        th = H_pad
    # Token tile: large for MXU utilization, but clamped to the (padded) token count.
    tm = max(8, min(tm, _round_up(N, 8)))
    N_pad = _round_up(N, tm)

    xf = x.reshape(N, D)
    xp = jnp.pad(xf, ((0, N_pad - N), (0, D_pad - D))).astype(jnp.bfloat16)
    w1p = jnp.pad(w1, ((0, D_pad - D), (0, H_pad - H))).astype(jnp.bfloat16)
    b1p = jnp.pad(b1, ((0, 0), (0, H_pad - H))).astype(jnp.float32)
    w2p = jnp.pad(w2, ((0, H_pad - H), (0, D_pad - D))).astype(jnp.bfloat16)
    b2p = jnp.pad(b2, ((0, 0), (0, D_pad - D))).astype(jnp.float32)

    kernel = functools.partial(ffn_kernel, dropout_p=dropout_p, training=training)
    out = pl.pallas_call(
        kernel,
        out_shape=jax.ShapeDtypeStruct((N_pad, D_pad), x.dtype),
        grid_spec=pltpu.PrefetchScalarGridSpec(
            num_scalar_prefetch=1,                      # dropout seed -> SMEM
            grid=(N_pad // tm, H_pad // th),
            in_specs=[
                pl.BlockSpec((tm, D_pad), lambda i, j, seed: (i, 0)),   # x tile (resident over j)
                pl.BlockSpec((D_pad, th), lambda i, j, seed: (0, j)),   # W1 chunk (streamed)
                pl.BlockSpec((1, th),     lambda i, j, seed: (0, j)),   # b1 chunk
                pl.BlockSpec((th, D_pad), lambda i, j, seed: (j, 0)),   # W2 chunk (streamed)
                pl.BlockSpec((1, D_pad),  lambda i, j, seed: (0, 0)),   # b2 (constant)
            ],
            out_specs=pl.BlockSpec((tm, D_pad), lambda i, j, seed: (i, 0)),
            scratch_shapes=[pltpu.VMEM((tm, D_pad), jnp.float32)],      # f32 accumulator
        ),
        compiler_params=pltpu.CompilerParams(
            dimension_semantics=("parallel", "arbitrary"),
            vmem_limit_bytes=48 * 1024 * 1024,          # headroom even on v7x (64 MiB/TC)
        ),
    )(jnp.asarray([seed], jnp.int32), xp, w1p, b1p, w2p, b2p)
    return out[:N, :D].reshape(B, S, D)


def init_params(key, dimension, overparameterized_dimension):
    """Deterministic init mimicking torch.nn.Linear (uniform +/- 1/sqrt(fan_in))."""
    k1, k2, k3, k4 = jax.random.split(key, 4)
    bound1 = 1.0 / (dimension ** 0.5)
    bound2 = 1.0 / (overparameterized_dimension ** 0.5)
    # stored as (in, out) == torch weight (out, in) transposed
    w1 = jax.random.uniform(k1, (dimension, overparameterized_dimension),
                            jnp.float32, -bound1, bound1)
    b1 = jax.random.uniform(k2, (1, overparameterized_dimension),
                            jnp.float32, -bound1, bound1)
    w2 = jax.random.uniform(k3, (overparameterized_dimension, dimension),
                            jnp.float32, -bound2, bound2)
    b2 = jax.random.uniform(k4, (1, dimension), jnp.float32, -bound2, bound2)
    return w1, b1, w2, b2


if __name__ == "__main__":
    batch, seq, dim, hidden = 2, 8, 32, 64
    dropout_probability = 0.1

    key = jax.random.PRNGKey(0)
    kx, kp = jax.random.split(key)
    x = jax.random.normal(kx, (batch, seq, dim), jnp.float32)
    w1, b1, w2, b2 = init_params(kp, dim, hidden)

    # Eval-mode forward (dropout is identity, matching torch.nn.Dropout.eval()).
    out = positionwise_feedforward(x, w1, b1, w2, b2,
                                   dropout_p=dropout_probability, training=False)
    out = jax.block_until_ready(out)

    # Sanity check against a pure-JAX f32 reference of the same math
    # (bf16 MXU operands loosen the tolerance vs the f32 reference).
    ref = jnp.maximum(x.reshape(-1, dim) @ w1 + b1, 0.0) @ w2 + b2
    ref = ref.reshape(batch, seq, dim)
    assert jnp.allclose(out, ref, atol=5e-2, rtol=5e-2), "mismatch vs reference"

    print("KERNEL_OK")
</pallas_src>

<mosaic_0001>
module attributes {stable_mosaic.version = 11 : i64} {
  func.func @ffn_kernel(%arg0: i32, %arg1: i32, %arg2: memref<1xi32, #tpu.memory_space<smem>>, %arg3: memref<16x128xbf16, #tpu.memory_space<vmem>>, %arg4: memref<128x128xbf16, #tpu.memory_space<vmem>>, %arg5: memref<1x128xf32, #tpu.memory_space<vmem>>, %arg6: memref<128x128xbf16, #tpu.memory_space<vmem>>, %arg7: memref<1x128xf32, #tpu.memory_space<vmem>>, %arg8: memref<16x128xf32, #tpu.memory_space<vmem>>, %arg9: memref<16x128xf32, #tpu.memory_space<vmem>>) attributes {dimension_semantics = [#tpu.dimension_semantics<parallel>, #tpu.dimension_semantics<arbitrary>], iteration_bounds = array<i64: 1, 1>, scalar_prefetch = 1 : i64, scratch_operands = 1 : i64, tpu.core_type = #tpu.core_type<tc>, window_params = [{transform_indices = @transform_0, window_bounds = array<i64: 16, 128>}, {transform_indices = @transform_1, window_bounds = array<i64: 128, 128>}, {transform_indices = @transform_2, window_bounds = array<i64: 1, 128>}, {transform_indices = @transform_3, window_bounds = array<i64: 128, 128>}, {pipeline_mode = #tpu.pipeline_mode<synchronous>, transform_indices = @transform_4, window_bounds = array<i64: 1, 128>}, {transform_indices = @transform_5, window_bounds = array<i64: 16, 128>}]} {
    %c0_i32 = arith.constant 0 : i32
    %0 = arith.cmpi eq, %arg1, %c0_i32 : i32
    %1 = arith.extui %0 : i1 to i32
    %c0_i32_0 = arith.constant 0 : i32
    %2 = arith.cmpi ne, %1, %c0_i32_0 : i32
    scf.if %2 {
      %cst_16 = arith.constant 0.000000e+00 : f32
      %20 = vector.broadcast %cst_16 : f32 to vector<16x128xf32>
      %c0_17 = arith.constant 0 : index
      %c0_18 = arith.constant 0 : index
      %21 = vector.load %arg9[%c0_17, %c0_18] : memref<16x128xf32, #tpu.memory_space<vmem>>, vector<16x128xf32>
      tpu.vector_store %arg9[%c0_17, %c0_18], %20 {strides = array<i32>} : memref<16x128xf32, #tpu.memory_space<vmem>>, vector<16x128xf32>,
    } else {
    }
    %c0 = arith.constant 0 : index
    %c0_1 = arith.constant 0 : index
    %3 = vector.load %arg3[%c0, %c0_1] : memref<16x128xbf16, #tpu.memory_space<vmem>>, vector<16x128xbf16>
    %c0_2 = arith.constant 0 : index
    %c0_3 = arith.constant 0 : index
    %4 = vector.load %arg4[%c0_2, %c0_3] : memref<128x128xbf16, #tpu.memory_space<vmem>>, vector<128x128xbf16>
    %cst = arith.constant dense<0.000000e+00> : vector<16x128xf32>
    %5 = tpu.matmul %3, %4, %cst {dimension_numbers = #tpu.dot_dimension_numbers<[1], [0], [0], [1], [0, 0, 1, 1], [], []>} : vector<16x128xbf16>, vector<128x128xbf16>, vector<16x128xf32> -> vector<16x128xf32>
    %c0_4 = arith.constant 0 : index
    %c0_5 = arith.constant 0 : index
    %6 = vector.load %arg5[%c0_4, %c0_5] : memref<1x128xf32, #tpu.memory_space<vmem>>, vector<1x128xf32>
    %7 = vector.broadcast %6 : vector<1x128xf32> to vector<16x128xf32>
    %8 = arith.addf %5, %7 : vector<16x128xf32>
    %cst_6 = arith.constant 0.000000e+00 : f32
    %9 = vector.broadcast %cst_6 : f32 to vector<16x128xf32>
    %10 = arith.maximumf %8, %9 : vector<16x128xf32>
    %c0_7 = arith.constant 0 : index
    %c0_8 = arith.constant 0 : index
    %11 = vector.load %arg9[%c0_7, %c0_8] : memref<16x128xf32, #tpu.memory_space<vmem>>, vector<16x128xf32>
    %12 = arith.truncf %10 : vector<16x128xf32> to vector<16x128xbf16>
    %c0_9 = arith.constant 0 : index
    %c0_10 = arith.constant 0 : index
    %13 = vector.load %arg6[%c0_9, %c0_10] : memref<128x128xbf16, #tpu.memory_space<vmem>>, vector<128x128xbf16>
    %cst_11 = arith.constant dense<0.000000e+00> : vector<16x128xf32>
    %14 = tpu.matmul %12, %13, %cst_11 {dimension_numbers = #tpu.dot_dimension_numbers<[1], [0], [0], [1], [0, 0, 1, 1], [], []>} : vector<16x128xbf16>, vector<128x128xbf16>, vector<16x128xf32> -> vector<16x128xf32>
    %15 = arith.addf %11, %14 : vector<16x128xf32>
    %c0_12 = arith.constant 0 : index
    %c0_13 = arith.constant 0 : index
    %16 = vector.load %arg9[%c0_12, %c0_13] : memref<16x128xf32, #tpu.memory_space<vmem>>, vector<16x128xf32>
    tpu.vector_store %arg9[%c0_12, %c0_13], %15 {strides = array<i32>} : memref<16x128xf32, #tpu.memory_space<vmem>>, vector<16x128xf32>,
    %c0_i32_14 = arith.constant 0 : i32
    %17 = arith.cmpi eq, %arg1, %c0_i32_14 : i32
    %18 = arith.extui %17 : i1 to i32
    %c0_i32_15 = arith.constant 0 : i32
    %19 = arith.cmpi ne, %18, %c0_i32_15 : i32
    scf.if %19 {
      %c0_16 = arith.constant 0 : index
      %c0_17 = arith.constant 0 : index
      %20 = vector.load %arg9[%c0_16, %c0_17] : memref<16x128xf32, #tpu.memory_space<vmem>>, vector<16x128xf32>
      %c0_18 = arith.constant 0 : index
      %c0_19 = arith.constant 0 : index
      %21 = vector.load %arg7[%c0_18, %c0_19] : memref<1x128xf32, #tpu.memory_space<vmem>>, vector<1x128xf32>
      %22 = vector.broadcast %21 : vector<1x128xf32> to vector<16x128xf32>
      %23 = arith.addf %20, %22 : vector<16x128xf32>
      %c0_20 = arith.constant 0 : index
      %c0_21 = arith.constant 0 : index
      %24 = vector.load %arg8[%c0_20, %c0_21] : memref<16x128xf32, #tpu.memory_space<vmem>>, vector<16x128xf32>
      tpu.vector_store %arg8[%c0_20, %c0_21], %23 {strides = array<i32>} : memref<16x128xf32, #tpu.memory_space<vmem>>, vector<16x128xf32>,
    } else {
    }
    return
  }
  func.func @transform_0(%arg0: i32, %arg1: i32, %arg2: memref<1xi32, #tpu.memory_space<smem>>) -> (i32, i32) {
    %c0_i32 = arith.constant 0 : i32
    %c0_i32_0 = arith.constant 0 : i32
    return %arg0, %c0_i32 : i32, i32
  }
  func.func @transform_1(%arg0: i32, %arg1: i32, %arg2: memref<1xi32, #tpu.memory_space<smem>>) -> (i32, i32) {
    %c0_i32 = arith.constant 0 : i32
    %c0_i32_0 = arith.constant 0 : i32
    return %c0_i32, %arg1 : i32, i32
  }
  func.func @transform_2(%arg0: i32, %arg1: i32, %arg2: memref<1xi32, #tpu.memory_space<smem>>) -> (i32, i32) {
    %c0_i32 = arith.constant 0 : i32
    %c0_i32_0 = arith.constant 0 : i32
    return %c0_i32, %arg1 : i32, i32
  }
  func.func @transform_3(%arg0: i32, %arg1: i32, %arg2: memref<1xi32, #tpu.memory_space<smem>>) -> (i32, i32) {
    %c0_i32 = arith.constant 0 : i32
    %c0_i32_0 = arith.constant 0 : i32
    return %arg1, %c0_i32 : i32, i32
  }
  func.func @transform_4(%arg0: i32, %arg1: i32, %arg2: memref<1xi32, #tpu.memory_space<smem>>) -> (i32, i32) {
    %c0_i32 = arith.constant 0 : i32
    %c0_i32_0 = arith.constant 0 : i32
    %c0_i32_1 = arith.constant 0 : i32
    return %c0_i32, %c0_i32_0 : i32, i32
  }
  func.func @transform_5(%arg0: i32, %arg1: i32, %arg2: memref<1xi32, #tpu.memory_space<smem>>) -> (i32, i32) {
    %c0_i32 = arith.constant 0 : i32
    %c0_i32_0 = arith.constant 0 : i32
    return %arg0, %c0_i32 : i32, i32
  }
}

</mosaic_0001>

<llo_original>
// kernel: tpu_custom_call.1
$region0: #{tpu_custom_call.1}
  #allocation0 [shape = 'u32[]', space=smem, size = 0x4, offset = 0x4, fixed_abs, tag = 'smem constant byte address 0x4 - core index']
  #allocation1 [shape = 'u32[144,128]{1,0:T(1,128)}', space=vmem, size = 0x12000, scoped, tag = 'internal scratch']
  #allocation2 [shape = 'f32[16,128]{1,0:T(8,128)}', space=vmem, size = 0x2000, scoped, tag = 'scratch operand']
  #allocation3 [shape = 's32[1]{0}', space=sflag, size = 0x4, scoped, tag = 'scoped memory for tpu_custom_call.1']
  #allocation4 [shape = 's32[1]{0:T(128)S(6)}', space=smem, size = 0x200, scoped, tag = 'prefetched SMEM operand 0']
  %s0 = inlined_call_operand.<no memory space> [shape: s32[1], index: 0, kind: input, shape index: {}]
  %s1 = inlined_call_operand.hbm [shape: bf16[16,128], index: 1, kind: input, shape index: {}]
  %s2 = inlined_call_operand.hbm [shape: bf16[128,128], index: 2, kind: input, shape index: {}]
  %s3 = inlined_call_operand.vmem [shape: f32[1,128], index: 3, kind: input, shape index: {}]
  %s4 = inlined_call_operand.hbm [shape: bf16[128,128], index: 4, kind: input, shape index: {}]
  %s5 = inlined_call_operand.vmem [shape: f32[1,128], index: 5, kind: input, shape index: {}]
  %s6 = inlined_call_operand.hbm [shape: f32[16,128], index: 6, kind: output, shape index: {}]
  %s7 = sld [smem:[#allocation0]]
  $region50: #{tpu_custom_call.1} parent=0
    _
  %s9 = ssub.s32 1, %s7
  %s10 = scalar_select 0, %s9, %s7
  %11 = sst [smem:[#allocation4]] %s0
  $region1: #{tpu_custom_call.1} parent=0
    #allocation5 [shape = 'u8[4096]{0}', space=vmem, size = 0x1000, scoped, tag = 'input window, operand 1, single buffered']
    #allocation6 [shape = 's32[1]{0}', space=sflag, size = 0x4, scoped, tag = 'scoped memory for tpu_custom_call.1']
    #allocation7 [shape = 's32[1]{0}', space=sflag, size = 0x4, scoped, tag = 'scoped memory for tpu_custom_call.1']
    #allocation8 [shape = 'u8[32768]{0}', space=vmem, size = 0x8000, scoped, tag = 'input window, operand 2, single buffered']
    #allocation9 [shape = 's32[1]{0}', space=sflag, size = 0x4, scoped, tag = 'scoped memory for tpu_custom_call.1']
    #allocation10 [shape = 'u8[32768]{0}', space=vmem, size = 0x8000, scoped, tag = 'input window, operand 4, single buffered']
    #allocation11 [shape = 'u8[8192]{0}', space=vmem, size = 0x2000, scoped, tag = 'output window, operand 0, single buffered']
    %12 = vsyncpa [#allocation6], 0
    %13 = vsyncpa [#allocation9], 0
    %14 = vsyncpa [#allocation7], 0
    // Predicated region
    $region2: #{tpu_custom_call.1} parent=1 // pred_check
      _
    $region3: #{tpu_custom_call.1} parent=1 // pred_check_branch
      %16 = sbr.rel (0) target = $region5
    $region4: #{tpu_custom_call.1} parent=1 // pred_region
      %s18 = ssub.s32 128, 128
      %19 = vsyncadd [#allocation6], %s18
      %s20 = sshll.u32 [#allocation5], 4
      %s21 = int_to_ptr.vmem [resolvable:$true] %s20
      %26 = dma.hbm_to_vmem [thread:$0]  %s1, 128, %s21, [#allocation6], 64, 64, 4
    $region5: #{tpu_custom_call.1} parent=1 // pred_fallthru
      _
    // Predicated region
    $region6: #{tpu_custom_call.1} parent=1 // pred_check
      _
    $region7: #{tpu_custom_call.1} parent=1 // pred_check_branch
      %28 = sbr.rel (0) target = $region9
    $region8: #{tpu_custom_call.1} parent=1 // pred_region
      %s30 = ssub.s32 1024, 1024
      %31 = vsyncadd [#allocation9], %s30
      %s32 = sshll.u32 [#allocation8], 4
      %s33 = int_to_ptr.vmem [resolvable:$true] %s32
      %38 = dma.hbm_to_vmem [thread:$0]  %s2, 1024, %s33, [#allocation9], 64, 64, 4
    $region9: #{tpu_custom_call.1} parent=1 // pred_fallthru
      _
    // Predicated region
    $region10: #{tpu_custom_call.1} parent=1 // pred_check
      _
    $region11: #{tpu_custom_call.1} parent=1 // pred_check_branch
      %40 = sbr.rel (0) target = $region13
    $region12: #{tpu_custom_call.1} parent=1 // pred_region
      _
    $region13: #{tpu_custom_call.1} parent=1 // pred_fallthru
      _
    // Predicated region
    $region14: #{tpu_custom_call.1} parent=1 // pred_check
      _
    $region15: #{tpu_custom_call.1} parent=1 // pred_check_branch
      %42 = sbr.rel (0) target = $region17
    $region16: #{tpu_custom_call.1} parent=1 // pred_region
      %s44 = ssub.s32 1024, 1024
      %45 = vsyncadd [#allocation9], %s44
      %s46 = sshll.u32 [#allocation10], 4
      %s47 = int_to_ptr.vmem [resolvable:$true] %s46
      %52 = dma.hbm_to_vmem [thread:$0]  %s4, 1024, %s47, [#allocation9], 64, 64, 4
    $region17: #{tpu_custom_call.1} parent=1 // pred_fallthru
      _
    // Predicated region
    $region18: #{tpu_custom_call.1} parent=1 // pred_check
      _
    $region19: #{tpu_custom_call.1} parent=1 // pred_check_branch
      %54 = sbr.rel (0) target = $region21
    $region20: #{tpu_custom_call.1} parent=1 // pred_region
      _
    $region21: #{tpu_custom_call.1} parent=1 // pred_fallthru
      _
    // Predicated region
    $region22: #{tpu_custom_call.1} parent=1 // pred_check
      _
    $region23: #{tpu_custom_call.1} parent=1 // pred_check_branch
      %56 = sbr.rel (0) target = $region25
    $region24: #{tpu_custom_call.1} parent=1 // pred_region
      %57 = dma.done [#allocation6], 128
    $region25: #{tpu_custom_call.1} parent=1 // pred_fallthru
      _
    // Predicated region
    $region26: #{tpu_custom_call.1} parent=1 // pred_check
      _
    $region27: #{tpu_custom_call.1} parent=1 // pred_check_branch
      %59 = sbr.rel (0) target = $region29
    $region28: #{tpu_custom_call.1} parent=1 // pred_region
      %60 = dma.done [#allocation9], 1024
    $region29: #{tpu_custom_call.1} parent=1 // pred_fallthru
      _
    // Predicated region
    $region30: #{tpu_custom_call.1} parent=1 // pred_check
      _
    $region31: #{tpu_custom_call.1} parent=1 // pred_check_branch
      %62 = sbr.rel (0) target = $region33
    $region32: #{tpu_custom_call.1} parent=1 // pred_region
      %63 = dma.done [#allocation9], 1024
    $region33: #{tpu_custom_call.1} parent=1 // pred_fallthru
      _
    %p65 = scmp.eq.s32.totalorder 0, 0
    // Predicated region
    $region34: #{tpu_custom_call.1} parent=1 // pred_check
      %p66 = pneg %p65
    $region35: #{tpu_custom_call.1} parent=1 // pred_check_branch
      %68 = sbr.rel (%p66) target = $region37
    $region36: #{tpu_custom_call.1} parent=1 // pred_region
      %69 = vst [vmem:[#allocation2] sm:$0xff] 0.0
      %70 = vst [vmem:[#allocation2 + $0x8] sm:$0xff] 0.0
    $region37: #{tpu_custom_call.1} parent=1 // pred_fallthru
      _
    %v71 = vld [vmem:[#allocation5] sm:$0xf]
    %v72 = vld [vmem:[#allocation5 + $0x4] sm:$0xf]
    %v73 = vld [vmem:[#allocation8] sm:$0xf]
    %v74 = vld [vmem:[#allocation8 + $0x4] sm:$0xf]
    %v75 = vld [vmem:[#allocation8 + $0x8] sm:$0xf]
    %v76 = vld [vmem:[#allocation8 + $0xc] sm:$0xf]
    %v77 = vld [vmem:[#allocation8 + $0x10] sm:$0xf]
    %v78 = vld [vmem:[#allocation8 + $0x14] sm:$0xf]
    %v79 = vld [vmem:[#allocation8 + $0x18] sm:$0xf]
    %v80 = vld [vmem:[#allocation8 + $0x1c] sm:$0xf]
    %v81 = vld [vmem:[#allocation8 + $0x20] sm:$0xf]
    %v82 = vld [vmem:[#allocation8 + $0x24] sm:$0xf]
    %v83 = vld [vmem:[#allocation8 + $0x28] sm:$0xf]
    %v84 = vld [vmem:[#allocation8 + $0x2c] sm:$0xf]
    %v85 = vld [vmem:[#allocation8 + $0x30] sm:$0xf]
    %v86 = vld [vmem:[#allocation8 + $0x34] sm:$0xf]
    %v87 = vld [vmem:[#allocation8 + $0x38] sm:$0xf]
    %v88 = vld [vmem:[#allocation8 + $0x3c] sm:$0xf]
    %v89 = vld [vmem:[%s3] sm:$0x1]
    %v91 = vlaneseq
    %v92 = vshrl.u32 %v91, 7
    %v93 = vsub.s32 0, %v92
    %v94 = vrot.slane %v89, %v93
    %v98 = vunpack.c.l.b16 %v71
    %v99 = vunpack.c.l.b16 %v72
    %v100 = vpack.c.b16 %v99, %v98
    %v118 = vunpack.c.l.b16 %v73
    %v119 = vunpack.c.l.b16 %v74
    %v120 = vunpack.c.l.b16 %v75
    %v121 = vunpack.c.l.b16 %v76
    %v122 = vunpack.c.l.b16 %v77
    %v123 = vunpack.c.l.b16 %v78
    %v124 = vunpack.c.l.b16 %v79
    %v125 = vunpack.c.l.b16 %v80
    %v126 = vunpack.c.l.b16 %v81
    %v127 = vunpack.c.l.b16 %v82
    %v128 = vunpack.c.l.b16 %v83
    %v129 = vunpack.c.l.b16 %v84
    %v130 = vunpack.c.l.b16 %v85
    %v131 = vunpack.c.l.b16 %v86
    %v132 = vunpack.c.l.b16 %v87
    %v133 = vunpack.c.l.b16 %v88
    %v134 = vpack.c.b16 %v119, %v118
    %v135 = vpack.c.b16 %v121, %v120
    %v136 = vpack.c.b16 %v123, %v122
    %v137 = vpack.c.b16 %v125, %v124
    %v138 = vpack.c.b16 %v127, %v126
    %v139 = vpack.c.b16 %v129, %v128
    %v140 = vpack.c.b16 %v131, %v130
    %v141 = vpack.c.b16 %v133, %v132
    %150 = vmatprep.subr.bf16.mxu0 0
    %151 = vmatpush1.bf16.msra.mxu0 %v134
    %152 = vmatprep.subr.bf16.mxu0 0
    %153 = vmatpush1.bf16.msra.mxu0 %v135
    %154 = vmatprep.subr.bf16.mxu0 0
    %155 = vmatpush1.bf16.msra.mxu0 %v136
    %156 = vmatprep.subr.bf16.mxu0 0
    %157 = vmatpush1.bf16.msra.mxu0 %v137
    %158 = vmatprep.subr.bf16.mxu0 0
    %159 = vmatpush1.bf16.msra.mxu0 %v138
    %160 = vmatprep.subr.bf16.mxu0 0
    %161 = vmatpush1.bf16.msra.mxu0 %v139
    %162 = vmatprep.subr.bf16.mxu0 0
    %163 = vmatpush1.bf16.msra.mxu0 %v140
    %164 = vmatprep.subr.bf16.mxu0 0
    %165 = vmatpush1.bf16.msra.mxu0 %v141
    %166 = vmatprep.subr.bf16.mxu0 0
    %167 = vmatpush1.bf16.msra.mxu0 0
    %168 = vmatprep.subr.bf16.mxu0 0
    %169 = vmatpush1.bf16.msra.mxu0 0
    %170 = vmatprep.subr.bf16.mxu0 0
    %171 = vmatpush1.bf16.msra.mxu0 0
    %172 = vmatprep.subr.bf16.mxu0 0
    %173 = vmatpush1.bf16.msra.mxu0 0
    %174 = vmatprep.subr.bf16.mxu0 0
    %175 = vmatpush1.bf16.msra.mxu0 0
    %176 = vmatprep.subr.bf16.mxu0 0
    %177 = vmatpush1.bf16.msra.mxu0 0
    %178 = vmatprep.subr.bf16.mxu0 0
    %179 = vmatpush1.bf16.msra.mxu0 0
    %180 = vmatprep.subr.bf16.mxu0 0
    %181 = vmatpush1.bf16.msra.mxu0 0
    %182 = vmatprep.mubr.bf16.mxu0 0
    %183 = vmatmul.mubr.bf16.gmra.mrb[0].mxu0 %v100
    %v184 = vpop.f32.mrb[0].mxu0
    %v185 = vadd.f32 %v94, %v184
    %v186 = vpop.f32.mrb[0].mxu0
    %v187 = vpop.f32.mrb[0].mxu0
    %v188 = vadd.f32 %v94, %v187
    %v189 = vpop.f32.mrb[0].mxu0
    %190 = vdwg.mxu0
    %v191 = vmax.f32 %v185, 0.0
    %v192 = vmax.f32 %v188, 0.0
    %v193 = vld [vmem:[#allocation2] sm:$0xff]
    %v194 = vld [vmem:[#allocation2 + $0x8] sm:$0xff]
    %v195 = vpack.c.bf16 %v192, %v191
    %v196 = vld [vmem:[#allocation10] sm:$0xf]
    %v197 = vld [vmem:[#allocation10 + $0x4] sm:$0xf]
    %v198 = vld [vmem:[#allocation10 + $0x8] sm:$0xf]
    %v199 = vld [vmem:[#allocation10 + $0xc] sm:$0xf]
    %v200 = vld [vmem:[#allocation10 + $0x10] sm:$0xf]
    %v201 = vld [vmem:[#allocation10 + $0x14] sm:$0xf]
    %v202 = vld [vmem:[#allocation10 + $0x18] sm:$0xf]
    %v203 = vld [vmem:[#allocation10 + $0x1c] sm:$0xf]
    %v204 = vld [vmem:[#allocation10 + $0x20] sm:$0xf]
    %v205 = vld [vmem:[#allocation10 + $0x24] sm:$0xf]
    %v206 = vld [vmem:[#allocation10 + $0x28] sm:$0xf]
    %v207 = vld [vmem:[#allocation10 + $0x2c] sm:$0xf]
    %v208 = vld [vmem:[#allocation10 + $0x30] sm:$0xf]
    %v209 = vld [vmem:[#allocation10 + $0x34] sm:$0xf]
    %v210 = vld [vmem:[#allocation10 + $0x38] sm:$0xf]
    %v211 = vld [vmem:[#allocation10 + $0x3c] sm:$0xf]
    %v228 = vunpack.c.l.b16 %v196
    %v229 = vunpack.c.l.b16 %v197
    %v230 = vunpack.c.l.b16 %v198
    %v231 = vunpack.c.l.b16 %v199
    %v232 = vunpack.c.l.b16 %v200
    %v233 = vunpack.c.l.b16 %v201
    %v234 = vunpack.c.l.b16 %v202
    %v235 = vunpack.c.l.b16 %v203
    %v236 = vunpack.c.l.b16 %v204
    %v237 = vunpack.c.l.b16 %v205
    %v238 = vunpack.c.l.b16 %v206
    %v239 = vunpack.c.l.b16 %v207
    %v240 = vunpack.c.l.b16 %v208
    %v241 = vunpack.c.l.b16 %v209
    %v242 = vunpack.c.l.b16 %v210
    %v243 = vunpack.c.l.b16 %v211
    %v244 = vpack.c.b16 %v229, %v228
    %v245 = vpack.c.b16 %v231, %v230
    %v246 = vpack.c.b16 %v233, %v232
    %v247 = vpack.c.b16 %v235, %v234
    %v248 = vpack.c.b16 %v237, %v236
    %v249 = vpack.c.b16 %v239, %v238
    %v250 = vpack.c.b16 %v241, %v240
    %v251 = vpack.c.b16 %v243, %v242
    %260 = vmatprep.subr.bf16.mxu0 0
    %261 = vmatpush1.bf16.msra.mxu0 %v244
    %262 = vmatprep.subr.bf16.mxu0 0
    %263 = vmatpush1.bf16.msra.mxu0 %v245
    %264 = vmatprep.subr.bf16.mxu0 0
    %265 = vmatpush1.bf16.msra.mxu0 %v246
    %266 = vmatprep.subr.bf16.mxu0 0
    %267 = vmatpush1.bf16.msra.mxu0 %v247
    %268 = vmatprep.subr.bf16.mxu0 0
    %269 = vmatpush1.bf16.msra.mxu0 %v248
    %270 = vmatprep.subr.bf16.mxu0 0
    %271 = vmatpush1.bf16.msra.mxu0 %v249
    %272 = vmatprep.subr.bf16.mxu0 0
    %273 = vmatpush1.bf16.msra.mxu0 %v250
    %274 = vmatprep.subr.bf16.mxu0 0
    %275 = vmatpush1.bf16.msra.mxu0 %v251
    %276 = vmatprep.subr.bf16.mxu0 0
    %277 = vmatpush1.bf16.msra.mxu0 0
    %278 = vmatprep.subr.bf16.mxu0 0
    %279 = vmatpush1.bf16.msra.mxu0 0
    %280 = vmatprep.subr.bf16.mxu0 0
    %281 = vmatpush1.bf16.msra.mxu0 0
    %282 = vmatprep.subr.bf16.mxu0 0
    %283 = vmatpush1.bf16.msra.mxu0 0
    %284 = vmatprep.subr.bf16.mxu0 0
    %285 = vmatpush1.bf16.msra.mxu0 0
    %286 = vmatprep.subr.bf16.mxu0 0
    %287 = vmatpush1.bf16.msra.mxu0 0
    %288 = vmatprep.subr.bf16.mxu0 0
    %289 = vmatpush1.bf16.msra.mxu0 0
    %290 = vmatprep.subr.bf16.mxu0 0
    %291 = vmatpush1.bf16.msra.mxu0 0
    %292 = vmatprep.mubr.bf16.mxu0 0
    %293 = vmatmul.mubr.bf16.gmra.mrb[0].mxu0 %v195
    %v294 = vpop.f32.mrb[0].mxu0
    %v295 = vadd.f32 0.0, %v294
    %v296 = vpop.f32.mrb[0].mxu0
    %v297 = vpop.f32.mrb[0].mxu0
    %v298 = vadd.f32 0.0, %v297
    %v299 = vpop.f32.mrb[0].mxu0
    %300 = vdwg.mxu0
    %v301 = vadd.f32 %v193, %v295
    %v302 = vadd.f32 %v194, %v298
    %303 = vst [vmem:[#allocation2] sm:$0xff] %v301
    %304 = vst [vmem:[#allocation2 + $0x8] sm:$0xff] %v302
    // Predicated region
    $region38: #{tpu_custom_call.1} parent=1 // pred_check
      %p305 = pneg %p65
    $region39: #{tpu_custom_call.1} parent=1 // pred_check_branch
      %307 = sbr.rel (%p305) target = $region41
    $region40: #{tpu_custom_call.1} parent=1 // pred_region
      %v308 = vld [vmem:[#allocation2] sm:$0xff]
      %v309 = vld [vmem:[#allocation2 + $0x8] sm:$0xff]
      %v310 = vld [vmem:[%s5] sm:$0x1]
      %v312 = vlaneseq
      %v313 = vshrl.u32 %v312, 7
      %v314 = vsub.s32 0, %v313
      %v315 = vrot.slane %v310, %v314
      %v317 = vadd.f32 %v308, %v315
      %v318 = vadd.f32 %v309, %v315
      %319 = vst [vmem:[#allocation11] sm:$0xff] %v317
      %320 = vst [vmem:[#allocation11 + $0x8] sm:$0xff] %v318
    $region41: #{tpu_custom_call.1} parent=1 // pred_fallthru
      _
    // Predicated region
    $region42: #{tpu_custom_call.1} parent=1 // pred_check
      _
    $region43: #{tpu_custom_call.1} parent=1 // pred_check_branch
      %322 = sbr.rel (0) target = $region45
    $region44: #{tpu_custom_call.1} parent=1 // pred_region
      %s324 = ssub.s32 256, 256
      %325 = vsyncadd [#allocation7], %s324
      %s326 = sshll.u32 [#allocation11], 4
      %s327 = int_to_ptr.vmem [resolvable:$true] %s326
      %332 = dma.vmem_to_hbm [thread:$0]  %s327, 256, %s6, [#allocation7], 128, 128, 8
    $region45: #{tpu_custom_call.1} parent=1 // pred_fallthru
      _
    // Predicated region
    $region46: #{tpu_custom_call.1} parent=1 // pred_check
      _
    $region47: #{tpu_custom_call.1} parent=1 // pred_check_branch
      %334 = sbr.rel (0) target = $region49
    $region48: #{tpu_custom_call.1} parent=1 // pred_region
      %335 = dma.done [#allocation7], 256
    $region49: #{tpu_custom_call.1} parent=1 // pred_fallthru
      _
    %336 = vsyncpa [#allocation6], 1
    %337 = vsyncpa [#allocation9], 1
    %338 = vsyncpa [#allocation7], 1

</llo_original>
